<compile_context>
chip_gen: v6e
topology: v6e:2x2x1
jax: 0.10.0
libtpu: 0.0.40
codegen_flags: <defaults>
</compile_context>

<pallas_src>
import functools

import jax
import jax.numpy as jnp
from jax.experimental import pallas as pl
from jax.experimental.pallas import tpu as pltpu


LANE = 128
SUBLANE = 8


def _round_up(n, m):
    return ((n + m - 1) // m) * m


# ----------------------------- Pallas kernel ------------------------------ #

def sage_layer_kernel(adj_ref, hsrc_ref, hdst_ref, deg_ref, w_cat_ref, bias_ref,
                      out_ref, acc_ref, *, apply_relu: bool):
    """One fused SAGEConv('mean') layer for a tile of destination nodes.

    Grid: (dst row tiles [parallel], src K tiles [arbitrary]).

    adj_ref   : (TD, TS)          bf16 binary adjacency tile (dst x src)
    hsrc_ref  : (TS, Fin_p)       bf16 source-node feature tile
    hdst_ref  : (TD, Fin_p)       bf16 dst self features (row tile of same array)
    deg_ref   : (TD, 1)           f32 in-degree (clamped >= 1)
    w_cat_ref : (2*Fin_p, Fout_p) bf16 stacked [W_self; W_neigh]
    bias_ref  : (1, Fout_p)       f32
    out_ref   : (TD, Fout_p)      bf16 (hidden layers) / f32 (last layer)
    acc_ref   : (TD, Fin_p)       f32 VMEM scratch (neighbor-sum accumulator)
    """
    k = pl.program_id(1)

    @pl.when(k == 0)
    def _init():
        acc_ref[...] = jnp.zeros_like(acc_ref)

    # Neighbor-sum over this slab of source nodes (bf16 MXU, f32 accumulation).
    acc_ref[...] += jnp.dot(adj_ref[...], hsrc_ref[...],
                            preferred_element_type=jnp.float32)

    @pl.when(k == pl.num_programs(1) - 1)
    def _finalize():
        # Exact 'mean' aggregation: binary adjacency + f32 recip-degree scale
        # (EUP vrcp; effectively free).
        inv_deg = pl.reciprocal(deg_ref[...], approx=True)        # (TD, 1)
        h_neigh = acc_ref[...] * inv_deg

        # Fuse self- and neighbor-linear transforms into a single matmul with
        # doubled contraction dim: [h_dst | h_neigh] @ [W_self; W_neigh].
        # TODO(synk): on v5e (128-deep MXU) split this into two K=128 dots and
        # drop the concat (single vector-store slot on that generation).
        h_cat = jnp.concatenate(
            [hdst_ref[...], h_neigh.astype(jnp.bfloat16)], axis=-1)
        out = jnp.dot(h_cat, w_cat_ref[...], preferred_element_type=jnp.float32)

        out = out + bias_ref[...]
        if apply_relu:
            out = jnp.maximum(out, 0.0)
        out_ref[...] = out.astype(out_ref.dtype)


# ----------------------------- layer wrapper ------------------------------ #

def _choose_tile_d(d):
    """Dst-row tile: large for MXU M-utilization, but >= 2 grid steps on the
    'parallel' axis so both v7x TensorCores get work for small batches."""
    td = min(128, _round_up(d, SUBLANE))
    if d > SUBLANE and _round_up(d, td) // td < 2:
        td = _round_up((d + 1) // 2, SUBLANE)
    return max(td, SUBLANE)


def sage_layer(adj, h, layer_p, *, apply_relu, tile_d=None, max_tile_s=512):
    """Fused SAGEConv('mean') layer.

    adj     : (D, S) dense binary (0/1) in-adjacency, dst x src.
    h       : source-node features: either the logical (>=S, F) array or a
              previous layer's padded bf16 output (extra rows/cols are harmless
              because padded adjacency columns are zero).
    layer_p : prepared layer params (padded bf16 W_cat, f32 bias, dims).
    Returns the padded output (D_pad, Fout_pad); bf16 for hidden layers,
    f32 for the last layer.  Slice to the logical shape at the end of the net.
    """
    D, S = adj.shape
    fin, fout = layer_p["fin"], layer_p["fout"]
    fin_pad, fout_pad = layer_p["fin_pad"], layer_p["fout_pad"]
    w_cat, bias_p = layer_p["w_cat"], layer_p["bias"]

    if tile_d is None:
        tile_d = _choose_tile_d(D)
    D_pad = _round_up(D, tile_d)

    tile_s = min(max_tile_s, _round_up(S, LANE))
    S_pad = _round_up(S, tile_s)

    rows_needed = max(S_pad, D_pad)   # one slab serves both src and dst views

    # --- source/dst features: single bf16 padded slab (built only if needed) --
    if (h.dtype == jnp.bfloat16 and h.shape[1] == fin_pad
            and h.shape[0] >= rows_needed):
        hs_p = h                                        # reuse prev layer's slab
    else:
        r = min(h.shape[0], rows_needed)
        c = min(h.shape[1], fin_pad)
        hs_p = jnp.zeros((rows_needed, fin_pad), jnp.bfloat16
                         ).at[:r, :c].set(h[:r, :c].astype(jnp.bfloat16))

    # --- binary adjacency: cast to bf16 first, pad once in bf16 (exact 0/1) ---
    adj_p = jnp.zeros((D_pad, S_pad), jnp.bfloat16
                      ).at[:D, :S].set(adj.astype(jnp.bfloat16))

    # In-degree, clamped >= 1 (zero-degree / padded rows -> h_neigh = 0, finite).
    deg = jnp.maximum(jnp.sum(adj.astype(jnp.float32), axis=1, keepdims=True), 1.0)
    deg_p = jnp.ones((D_pad, 1), jnp.float32).at[:D].set(deg)

    out_dtype = jnp.bfloat16 if apply_relu else jnp.float32
    out_bytes = 2 if out_dtype == jnp.bfloat16 else 4

    # --- VMEM budget: actual tile footprint, clamped to 75% of physical VMEM ---
    footprint = (
        2 * tile_d * tile_s * 2              # adj tiles (bf16, double-buffered)
        + 2 * tile_s * fin_pad * 2           # h_src tiles
        + 2 * tile_d * fin_pad * 2           # h_dst tiles
        + 2 * tile_d * 4                     # degree column
        + 2 * 2 * fin_pad * fout_pad * 2     # stacked weights
        + 2 * fout_pad * 4                   # bias
        + 2 * tile_d * fout_pad * out_bytes  # output tiles
        + tile_d * fin_pad * 4               # f32 accumulator scratch
    )
    try:
        vmem_cap = pltpu.get_tpu_info().vmem_capacity_bytes
    except Exception:                        # conservative: assume v7x (64 MiB)
        vmem_cap = 64 * 1024 * 1024
    vmem_limit = int(min(0.75 * vmem_cap, max(2 * footprint, 32 * 1024 * 1024)))

    kernel = functools.partial(sage_layer_kernel, apply_relu=apply_relu)

    # TODO(synk): the grid-invariant operands (h_src slab in the K=1 case,
    # w_cat, bias) could be single-buffered via pipeline_mode=pl.Buffered(1)
    # to halve their VMEM footprint on v7x.
    # TODO(synk): for real sampled blocks, exploit sparsity (scalar-prefetch
    # neighbor lists / skip all-zero (i,k) adjacency tiles) instead of
    # streaming the dense binary adjacency.
    out_p = pl.pallas_call(
        kernel,
        out_shape=jax.ShapeDtypeStruct((D_pad, fout_pad), out_dtype),
        grid=(D_pad // tile_d, S_pad // tile_s),
        in_specs=[
            pl.BlockSpec((tile_d, tile_s), lambda i, k: (i, k)),        # adj
            pl.BlockSpec((tile_s, fin_pad), lambda i, k: (k, 0)),       # h_src
            pl.BlockSpec((tile_d, fin_pad), lambda i, k: (i, 0)),       # h_dst (same array)
            pl.BlockSpec((tile_d, 1), lambda i, k: (i, 0)),             # degree
            pl.BlockSpec((2 * fin_pad, fout_pad), lambda i, k: (0, 0)), # [W_self;W_neigh]
            pl.BlockSpec((1, fout_pad), lambda i, k: (0, 0)),           # bias
        ],
        out_specs=pl.BlockSpec((tile_d, fout_pad), lambda i, k: (i, 0)),
        scratch_shapes=[pltpu.VMEM((tile_d, fin_pad), jnp.float32)],
        compiler_params=pltpu.CompilerParams(
            dimension_semantics=("parallel", "arbitrary"),
            vmem_limit_bytes=vmem_limit),
    )(adj_p, hs_p, hs_p, deg_p, w_cat, bias_p)

    return out_p


# ------------------------------- SAGE model -------------------------------- #

def init_sage_params(key, num_nodes, in_feats, n_hidden, n_classes, n_layers):
    """Deterministic parameter init matching the module's shapes."""
    dims = [in_feats] + [n_hidden] * (n_layers - 1) + [n_classes]
    keys = jax.random.split(key, 1 + 2 * n_layers)

    # nn.Embedding(num_nodes, in_feats)
    embed = jax.random.normal(keys[0], (num_nodes, in_feats), jnp.float32)

    layers = []
    for l in range(n_layers):
        fin, fout = dims[l], dims[l + 1]
        scale = 1.0 / jnp.sqrt(jnp.float32(fin))
        w_self = scale * jax.random.normal(keys[1 + 2 * l], (fin, fout), jnp.float32)
        w_neigh = scale * jax.random.normal(keys[2 + 2 * l], (fin, fout), jnp.float32)
        bias = jnp.zeros((fout,), jnp.float32)
        layers.append((w_self, w_neigh, bias))
    return embed, layers


def prepare_sage_params(layers):
    """Grid-invariant weight padding/casting, hoisted out of the forward path.
    Rows [0,Fin) of the stacked block hold W_self (acts on the h_dst half of
    h_cat); rows [Fin_pad, Fin_pad+Fin) hold W_neigh (acts on the h_neigh half)."""
    prepared = []
    for (w_self, w_neigh, bias) in layers:
        fin, fout = w_self.shape
        fin_pad = _round_up(fin, LANE)
        fout_pad = _round_up(fout, LANE)
        w_cat = jnp.zeros((2 * fin_pad, fout_pad), jnp.float32)
        w_cat = w_cat.at[:fin, :fout].set(w_self)
        w_cat = w_cat.at[fin_pad:fin_pad + fin, :fout].set(w_neigh)
        bias_p = jnp.zeros((1, fout_pad), jnp.float32).at[0, :fout].set(bias)
        prepared.append(dict(w_cat=w_cat.astype(jnp.bfloat16), bias=bias_p,
                             fin=fin, fout=fout,
                             fin_pad=fin_pad, fout_pad=fout_pad))
    return prepared


def sage_forward(embed, prepared_layers, blocks_adj, input_nodes):
    """SAGE forward: embedding lookup + stacked fused SAGEConv('mean') kernels.

    blocks_adj[l] is the dense binary (num_dst x num_src) in-adjacency of the
    sampled block; mean normalization (1/deg) happens inside the kernel in f32.
    """
    h = jnp.take(embed, input_nodes, axis=0)          # glue: embedding gather

    n_layers = len(prepared_layers)
    for l, (adj, lp) in enumerate(zip(blocks_adj, prepared_layers)):
        h = sage_layer(adj, h, lp, apply_relu=(l != n_layers - 1))
        # TODO(synk): nn.Dropout is identity in eval mode; training-mode dropout
        # (random masking) is not implemented here.

    num_dst_last = blocks_adj[-1].shape[0]
    return h[:num_dst_last, :prepared_layers[-1]["fout"]]


# ----------------------------- reference check ----------------------------- #

def sage_forward_ref(embed, layers, blocks_adj, input_nodes):
    h = jnp.take(embed, input_nodes, axis=0)
    n_layers = len(layers)
    for l, (adj, (w_self, w_neigh, bias)) in enumerate(zip(blocks_adj, layers)):
        h_dst = h[:adj.shape[0]]
        deg = jnp.maximum(jnp.sum(adj, axis=1, keepdims=True), 1.0)
        h_neigh = (adj @ h) / deg                     # 'mean' aggregation
        h = h_dst @ w_self + h_neigh @ w_neigh + bias[None, :]
        if l != n_layers - 1:
            h = jnp.maximum(h, 0.0)
    return h


# ---------------------------------- main ----------------------------------- #

if __name__ == "__main__":
    key = jax.random.PRNGKey(0)

    # Small synthetic config.
    num_nodes = 64     # total nodes in graph (embedding table rows)
    in_feats = 32
    n_hidden = 32
    n_classes = 8
    n_layers = 2       # SAGEConv(in->hidden), SAGEConv(hidden->classes)

    # Sampled "blocks": layer-0 block has S0 src / D0 dst, layer-1 has D0 src / D1 dst.
    S0, D0, D1 = 64, 32, 16

    k_param, k_nodes, k_a0, k_a1 = jax.random.split(key, 4)

    embed, layers = init_sage_params(
        k_param, num_nodes, in_feats, n_hidden, n_classes, n_layers)
    prepared = prepare_sage_params(layers)

    # input node ids for the first block's source nodes
    input_nodes = jax.random.randint(k_nodes, (S0,), 0, num_nodes)

    def make_block_adj(k, num_dst, num_src):
        # random binary adjacency (dst x src) + guaranteed self edge
        a = (jax.random.uniform(k, (num_dst, num_src)) < 0.3).astype(jnp.float32)
        a = a.at[jnp.arange(num_dst), jnp.arange(num_dst)].set(1.0)
        return a

    blocks_adj = [make_block_adj(k_a0, D0, S0), make_block_adj(k_a1, D1, D0)]

    out = sage_forward(embed, prepared, blocks_adj, input_nodes)
    out = jax.block_until_ready(out)
    assert out.shape == (D1, n_classes), out.shape

    # Reference in full f32; kernel uses bf16 matmul operands, bf16 hidden-layer
    # storage, and an approximate recip-degree, so validate with a loose tolerance.
    ref = sage_forward_ref(embed, layers, blocks_adj, input_nodes)
    assert jnp.allclose(out, ref, atol=1e-1, rtol=1e-1), (
        "mismatch vs reference, max abs err = "
        f"{float(jnp.max(jnp.abs(out - ref)))}")

    print("KERNEL_OK")
</pallas_src>

<mosaic_0001>
module attributes {stable_mosaic.version = 11 : i64} {
  func.func @sage_layer_kernel(%arg0: i32, %arg1: i32, %arg2: memref<16x128xbf16, #tpu.memory_space<vmem>>, %arg3: memref<128x128xbf16, #tpu.memory_space<vmem>>, %arg4: memref<16x128xbf16, #tpu.memory_space<vmem>>, %arg5: memref<16x1xf32, #tpu.memory_space<vmem>>, %arg6: memref<256x128xbf16, #tpu.memory_space<vmem>>, %arg7: memref<1x128xf32, #tpu.memory_space<vmem>>, %arg8: memref<16x128xbf16, #tpu.memory_space<vmem>>, %arg9: memref<16x128xf32, #tpu.memory_space<vmem>>) attributes {dimension_semantics = [#tpu.dimension_semantics<parallel>, #tpu.dimension_semantics<arbitrary>], iteration_bounds = array<i64: 2, 1>, scalar_prefetch = 0 : i64, scratch_operands = 1 : i64, tpu.core_type = #tpu.core_type<tc>, window_params = [{transform_indices = @transform_0, window_bounds = array<i64: 16, 128>}, {transform_indices = @transform_1, window_bounds = array<i64: 128, 128>}, {transform_indices = @transform_2, window_bounds = array<i64: 16, 128>}, {transform_indices = @transform_3, window_bounds = array<i64: 16, 1>}, {pipeline_mode = #tpu.pipeline_mode<synchronous>, transform_indices = @transform_4, window_bounds = array<i64: 256, 128>}, {pipeline_mode = #tpu.pipeline_mode<synchronous>, transform_indices = @transform_5, window_bounds = array<i64: 1, 128>}, {transform_indices = @transform_6, window_bounds = array<i64: 16, 128>}]} {
    %c0_i32 = arith.constant 0 : i32
    %0 = arith.cmpi eq, %arg1, %c0_i32 : i32
    %1 = arith.extui %0 : i1 to i32
    %c0_i32_0 = arith.constant 0 : i32
    %2 = arith.cmpi ne, %1, %c0_i32_0 : i32
    scf.if %2 {
      %cst_10 = arith.constant 0.000000e+00 : f32
      %12 = vector.broadcast %cst_10 : f32 to vector<16x128xf32>
      %c0_11 = arith.constant 0 : index
      %c0_12 = arith.constant 0 : index
      %13 = vector.load %arg9[%c0_11, %c0_12] : memref<16x128xf32, #tpu.memory_space<vmem>>, vector<16x128xf32>
      tpu.vector_store %arg9[%c0_11, %c0_12], %12 {strides = array<i32>} : memref<16x128xf32, #tpu.memory_space<vmem>>, vector<16x128xf32>,
    } else {
    }
    %c0 = arith.constant 0 : index
    %c0_1 = arith.constant 0 : index
    %3 = vector.load %arg9[%c0, %c0_1] : memref<16x128xf32, #tpu.memory_space<vmem>>, vector<16x128xf32>
    %c0_2 = arith.constant 0 : index
    %c0_3 = arith.constant 0 : index
    %4 = vector.load %arg2[%c0_2, %c0_3] : memref<16x128xbf16, #tpu.memory_space<vmem>>, vector<16x128xbf16>
    %c0_4 = arith.constant 0 : index
    %c0_5 = arith.constant 0 : index
    %5 = vector.load %arg3[%c0_4, %c0_5] : memref<128x128xbf16, #tpu.memory_space<vmem>>, vector<128x128xbf16>
    %cst = arith.constant dense<0.000000e+00> : vector<16x128xf32>
    %6 = tpu.matmul %4, %5, %cst {dimension_numbers = #tpu.dot_dimension_numbers<[1], [0], [0], [1], [0, 0, 1, 1], [], []>} : vector<16x128xbf16>, vector<128x128xbf16>, vector<16x128xf32> -> vector<16x128xf32>
    %7 = arith.addf %3, %6 : vector<16x128xf32>
    %c0_6 = arith.constant 0 : index
    %c0_7 = arith.constant 0 : index
    %8 = vector.load %arg9[%c0_6, %c0_7] : memref<16x128xf32, #tpu.memory_space<vmem>>, vector<16x128xf32>
    tpu.vector_store %arg9[%c0_6, %c0_7], %7 {strides = array<i32>} : memref<16x128xf32, #tpu.memory_space<vmem>>, vector<16x128xf32>,
    %c0_i32_8 = arith.constant 0 : i32
    %9 = arith.cmpi eq, %arg1, %c0_i32_8 : i32
    %10 = arith.extui %9 : i1 to i32
    %c0_i32_9 = arith.constant 0 : i32
    %11 = arith.cmpi ne, %10, %c0_i32_9 : i32
    scf.if %11 {
      %c0_10 = arith.constant 0 : index
      %c0_11 = arith.constant 0 : index
      %12 = vector.load %arg5[%c0_10, %c0_11] : memref<16x1xf32, #tpu.memory_space<vmem>>, vector<16x1xf32>
      %13 = tpu.reciprocal %12 {approx = true} : vector<16x1xf32> -> vector<16x1xf32>
      %c0_12 = arith.constant 0 : index
      %c0_13 = arith.constant 0 : index
      %14 = vector.load %arg9[%c0_12, %c0_13] : memref<16x128xf32, #tpu.memory_space<vmem>>, vector<16x128xf32>
      %15 = vector.broadcast %13 : vector<16x1xf32> to vector<16x128xf32>
      %16 = arith.mulf %14, %15 : vector<16x128xf32>
      %c0_14 = arith.constant 0 : index
      %c0_15 = arith.constant 0 : index
      %17 = vector.load %arg4[%c0_14, %c0_15] : memref<16x128xbf16, #tpu.memory_space<vmem>>, vector<16x128xbf16>
      %18 = arith.truncf %16 : vector<16x128xf32> to vector<16x128xbf16>
      %19 = tpu.concatenate %17, %18 in 1 : vector<16x128xbf16>, vector<16x128xbf16> -> vector<16x256xbf16>
      %c0_16 = arith.constant 0 : index
      %c0_17 = arith.constant 0 : index
      %20 = vector.load %arg6[%c0_16, %c0_17] : memref<256x128xbf16, #tpu.memory_space<vmem>>, vector<256x128xbf16>
      %cst_18 = arith.constant dense<0.000000e+00> : vector<16x128xf32>
      %21 = tpu.matmul %19, %20, %cst_18 {dimension_numbers = #tpu.dot_dimension_numbers<[1], [0], [0], [1], [0, 0, 1, 1], [], []>} : vector<16x256xbf16>, vector<256x128xbf16>, vector<16x128xf32> -> vector<16x128xf32>
      %c0_19 = arith.constant 0 : index
      %c0_20 = arith.constant 0 : index
      %22 = vector.load %arg7[%c0_19, %c0_20] : memref<1x128xf32, #tpu.memory_space<vmem>>, vector<1x128xf32>
      %23 = vector.broadcast %22 : vector<1x128xf32> to vector<16x128xf32>
      %24 = arith.addf %21, %23 : vector<16x128xf32>
      %cst_21 = arith.constant 0.000000e+00 : f32
      %25 = vector.broadcast %cst_21 : f32 to vector<16x128xf32>
      %26 = arith.maximumf %24, %25 : vector<16x128xf32>
      %27 = arith.truncf %26 : vector<16x128xf32> to vector<16x128xbf16>
      %c0_22 = arith.constant 0 : index
      %c0_23 = arith.constant 0 : index
      %28 = vector.load %arg8[%c0_22, %c0_23] : memref<16x128xbf16, #tpu.memory_space<vmem>>, vector<16x128xbf16>
      tpu.vector_store %arg8[%c0_22, %c0_23], %27 {strides = array<i32>} : memref<16x128xbf16, #tpu.memory_space<vmem>>, vector<16x128xbf16>,
    } else {
    }
    return
  }
  func.func @transform_0(%arg0: i32, %arg1: i32) -> (i32, i32) {
    %c0_i32 = arith.constant 0 : i32
    return %arg0, %arg1 : i32, i32
  }
  func.func @transform_1(%arg0: i32, %arg1: i32) -> (i32, i32) {
    %c0_i32 = arith.constant 0 : i32
    %c0_i32_0 = arith.constant 0 : i32
    return %arg1, %c0_i32 : i32, i32
  }
  func.func @transform_2(%arg0: i32, %arg1: i32) -> (i32, i32) {
    %c0_i32 = arith.constant 0 : i32
    %c0_i32_0 = arith.constant 0 : i32
    return %arg0, %c0_i32 : i32, i32
  }
  func.func @transform_3(%arg0: i32, %arg1: i32) -> (i32, i32) {
    %c0_i32 = arith.constant 0 : i32
    %c0_i32_0 = arith.constant 0 : i32
    return %arg0, %c0_i32 : i32, i32
  }
  func.func @transform_4(%arg0: i32, %arg1: i32) -> (i32, i32) {
    %c0_i32 = arith.constant 0 : i32
    %c0_i32_0 = arith.constant 0 : i32
    %c0_i32_1 = arith.constant 0 : i32
    return %c0_i32, %c0_i32_0 : i32, i32
  }
  func.func @transform_5(%arg0: i32, %arg1: i32) -> (i32, i32) {
    %c0_i32 = arith.constant 0 : i32
    %c0_i32_0 = arith.constant 0 : i32
    %c0_i32_1 = arith.constant 0 : i32
    return %c0_i32, %c0_i32_0 : i32, i32
  }
  func.func @transform_6(%arg0: i32, %arg1: i32) -> (i32, i32) {
    %c0_i32 = arith.constant 0 : i32
    %c0_i32_0 = arith.constant 0 : i32
    return %arg0, %c0_i32 : i32, i32
  }
}

</mosaic_0001>

<llo_original>
// kernel: tpu_custom_call.1
$region0: #{tpu_custom_call.1}
  #allocation0 [shape = 'u32[]', space=smem, size = 0x4, offset = 0x4, fixed_abs, tag = 'smem constant byte address 0x4 - core index']
  #allocation1 [shape = 'u32[144,128]{1,0:T(1,128)}', space=vmem, size = 0x12000, scoped, tag = 'internal scratch']
  #allocation2 [shape = 'f32[16,128]{1,0:T(8,128)}', space=vmem, size = 0x2000, scoped, tag = 'scratch operand']
  %s0 = inlined_call_operand.vmem [shape: bf16[32,128], index: 0, kind: input, shape index: {}]
  %s1 = inlined_call_operand.hbm [shape: bf16[128,128], index: 1, kind: input, shape index: {}]
  %s2 = inlined_call_operand.hbm [shape: bf16[128,128], index: 2, kind: input, shape index: {}]
  %s3 = inlined_call_operand.vmem [shape: f32[32,1], index: 3, kind: input, shape index: {}]
  %s4 = inlined_call_operand.hbm [shape: bf16[256,128], index: 4, kind: input, shape index: {}]
  %s5 = inlined_call_operand.vmem [shape: f32[1,128], index: 5, kind: input, shape index: {}]
  %s6 = inlined_call_operand.hbm [shape: bf16[32,128], index: 6, kind: output, shape index: {}]
  %s7 = sld [smem:[#allocation0]]
  $region77: #{tpu_custom_call.1} parent=0
    _
  %s9 = ssub.s32 1, %s7
  %s10 = scalar_select 0, %s9, %s7
  $region1: #{tpu_custom_call.1} parent=0
    #allocation3 [shape = 'u8[32768]{0}', space=vmem, size = 0x8000, scoped, tag = 'input window, operand 1, single buffered']
    #allocation4 [shape = 's32[2]{0}', space=sflag, size = 0x8, scoped, tag = 'scoped memory for tpu_custom_call.1']
    #allocation5 [shape = 's32[2]{0}', space=sflag, size = 0x8, scoped, tag = 'scoped memory for tpu_custom_call.1']
    #allocation6 [shape = 'u8[8192]{0}', space=vmem, size = 0x2000, scoped, tag = 'input window, operand 2']
    #allocation7 [shape = 's32[2]{0}', space=sflag, size = 0x8, scoped, tag = 'scoped memory for tpu_custom_call.1']
    #allocation8 [shape = 'u8[65536]{0}', space=vmem, size = 0x10000, scoped, tag = 'input window, operand 4, single buffered']
    #allocation9 [shape = 'u8[8192]{0}', space=vmem, size = 0x2000, scoped, tag = 'output window, operand 0']
    %11 = vsyncpa [#allocation4], 0
    %12 = vsyncpa [#allocation7], 0
    %s13 = scalar_lea.sflag [#allocation7], 1
    %14 = vsyncpa %s13, 0
    %15 = vsyncpa [#allocation5], 0
    %s16 = scalar_lea.sflag [#allocation5], 1
    %17 = vsyncpa %s16, 0
    loop: start=0, step=1, limit=4
    $region2: #{tpu_custom_call.1} parent=1 // loop_pre_header
      _
    $region3: #{tpu_custom_call.1} parent=1 // loop_header
      %s19 = sphi 0, %s23
      %p20 = scmp.ge.s32.totalorder %s19, 4
      %s26 = sphi 0, %s38
      %s27 = sphi 0, %s34
      %s28 = sphi 0, %s26
      %s29 = sphi 0, %s27
      %s30 = sphi 0, %s28
      %s31 = sphi 0, %s29
      %s43 = sphi 0, %s45
      %s46 = sphi 0, %s43
      %s47 = sphi 0, %s46
      %s63 = sphi 0, %s47
      %s69 = sphi 0, %s71
      %s72 = sphi 0, %s69
      %s73 = sphi 0, %s72
      %s89 = sphi 0, %s73
      %s95 = sphi 0, %s97
      %s98 = sphi 0, %s95
      %s99 = sphi 0, %s98
      %s115 = sphi 0, %s99
      %s121 = sphi 0, %s123
      %s124 = sphi 0, %s121
      %s125 = sphi 0, %s124
      %s141 = sphi 0, %s125
      %s145 = sphi 0, %s145
      %s147 = sphi 0, %s145
      %s148 = sphi 0, %s147
      %s162 = sphi 0, %s148
      %s166 = sphi 0, %s166
      %s168 = sphi 0, %s166
      %s169 = sphi 0, %s168
      %s183 = sphi 0, %s169
      %s189 = sphi 0, %s191
      %s192 = sphi 0, %s189
      %s193 = sphi 0, %s192
      %s209 = sphi 0, %s193
    $region4: #{tpu_custom_call.1} parent=1 // loop_header_branch
      %22 = sbr.rel (%p20) target = $region8
    $region5: #{tpu_custom_call.1} parent=1 // loop_body
      %s24 = ssub.s32 %s19, 1
      %s25 = ssub.s32 %s19, 2
      %s32 = sadd.s32 1, %s27
      %p33 = scmp.ge.s32.totalorder %s32, 1
      %s34 = scalar_select %p33, 0, %s32
      %s35 = sadd.s32 1, %s26
      %s36 = scalar_select %p33, %s35, %s26
      %p37 = scmp.ge.s32.totalorder %s36, 2
      %s38 = scalar_select %p37, 0, %s36
      %s39 = ssub.s32 %s26, %s38
      %s40 = ssub.s32 %s27, %s34
      %s41 = sor.u32 %s39, %s40
      %p42 = scmp.eq.s32.totalorder %s41, 0
      %s44 = sadd.s32 %s43, 1
      %s45 = scalar_select %p42, %s43, %s44
      %p48 = pneg %p42
      %p49 = scmp.eq.s32.totalorder %s19, 1
      %p50 = por %p48, %p49
      %p51 = scmp.ne.s32.totalorder %s43, %s46
      %p52 = scmp.eq.s32.totalorder %s19, 0
      %p53 = por %p51, %p52
      %p54 = scmp.ne.s32.totalorder %s43, %s46
      %p55 = scmp.eq.s32.totalorder %s24, 1
      %p56 = por %p54, %p55
      %p57 = scmp.ne.s32.totalorder %s46, %s47
      %p58 = scmp.eq.s32.totalorder %s24, 0
      %p59 = por %p57, %p58
      %p60 = scmp.ne.s32.totalorder %s46, %s47
      %p61 = scmp.eq.s32.totalorder %s25, 1
      %p62 = por %p60, %p61
      %p64 = scmp.ne.s32.totalorder %s47, %s63
      %p65 = scmp.eq.s32.totalorder %s25, 0
      %p66 = por %p64, %p65
      %s67 = ssub.s32 %s27, %s34
      %p68 = scmp.eq.s32.totalorder %s67, 0
      %s70 = sadd.s32 %s69, 1
      %s71 = scalar_select %p68, %s69, %s70
      %p74 = pneg %p68
      %p75 = scmp.eq.s32.totalorder %s19, 1
      %p76 = por %p74, %p75
      %p77 = scmp.ne.s32.totalorder %s69, %s72
      %p78 = scmp.eq.s32.totalorder %s19, 0
      %p79 = por %p77, %p78
      %p80 = scmp.ne.s32.totalorder %s69, %s72
      %p81 = scmp.eq.s32.totalorder %s24, 1
      %p82 = por %p80, %p81
      %p83 = scmp.ne.s32.totalorder %s72, %s73
      %p84 = scmp.eq.s32.totalorder %s24, 0
      %p85 = por %p83, %p84
      %p86 = scmp.ne.s32.totalorder %s72, %s73
      %p87 = scmp.eq.s32.totalorder %s25, 1
      %p88 = por %p86, %p87
      %p90 = scmp.ne.s32.totalorder %s73, %s89
      %p91 = scmp.eq.s32.totalorder %s25, 0
      %p92 = por %p90, %p91
      %s93 = ssub.s32 %s26, %s38
      %p94 = scmp.eq.s32.totalorder %s93, 0
      %s96 = sadd.s32 %s95, 1
      %s97 = scalar_select %p94, %s95, %s96
      %p100 = pneg %p94
      %p101 = scmp.eq.s32.totalorder %s19, 1
      %p102 = por %p100, %p101
      %p103 = scmp.ne.s32.totalorder %s95, %s98
      %p104 = scmp.eq.s32.totalorder %s19, 0
      %p105 = por %p103, %p104
      %p106 = scmp.ne.s32.totalorder %s95, %s98
      %p107 = scmp.eq.s32.totalorder %s24, 1
      %p108 = por %p106, %p107
      %p109 = scmp.ne.s32.totalorder %s98, %s99
      %p110 = scmp.eq.s32.totalorder %s24, 0
      %p111 = por %p109, %p110
      %p112 = scmp.ne.s32.totalorder %s98, %s99
      %p113 = scmp.eq.s32.totalorder %s25, 1
      %p114 = por %p112, %p113
      %p116 = scmp.ne.s32.totalorder %s99, %s115
      %p117 = scmp.eq.s32.totalorder %s25, 0
      %p118 = por %p116, %p117
      %s119 = ssub.s32 %s26, %s38
      %p120 = scmp.eq.s32.totalorder %s119, 0
      %s122 = sadd.s32 %s121, 1
      %s123 = scalar_select %p120, %s121, %s122
      %p126 = pneg %p120
      %p127 = scmp.eq.s32.totalorder %s19, 1
      %p128 = por %p126, %p127
      %p129 = scmp.ne.s32.totalorder %s121, %s124
      %p130 = scmp.eq.s32.totalorder %s19, 0
      %p131 = por %p129, %p130
      %p132 = scmp.ne.s32.totalorder %s121, %s124
      %p133 = scmp.eq.s32.totalorder %s24, 1
      %p134 = por %p132, %p133
      %p135 = scmp.ne.s32.totalorder %s124, %s125
      %p136 = scmp.eq.s32.totalorder %s24, 0
      %p137 = por %p135, %p136
      %p138 = scmp.ne.s32.totalorder %s124, %s125
      %p139 = scmp.eq.s32.totalorder %s25, 1
      %p140 = por %p138, %p139
      %p142 = scmp.ne.s32.totalorder %s125, %s141
      %p143 = scmp.eq.s32.totalorder %s25, 0
      %p144 = por %p142, %p143
      %s146 = sadd.s32 %s145, 1
      %p149 = scmp.eq.s32.totalorder %s19, 1
      %p150 = scmp.ne.s32.totalorder %s145, %s147
      %p151 = scmp.eq.s32.totalorder %s19, 0
      %p152 = por %p150, %p151
      %p153 = scmp.ne.s32.totalorder %s145, %s147
      %p154 = scmp.eq.s32.totalorder %s24, 1
      %p155 = por %p153, %p154
      %p156 = scmp.ne.s32.totalorder %s147, %s148
      %p157 = scmp.eq.s32.totalorder %s24, 0
      %p158 = por %p156, %p157
      %p159 = scmp.ne.s32.totalorder %s147, %s148
      %p160 = scmp.eq.s32.totalorder %s25, 1
      %p161 = por %p159, %p160
      %p163 = scmp.ne.s32.totalorder %s148, %s162
      %p164 = scmp.eq.s32.totalorder %s25, 0
      %p165 = por %p163, %p164
      %s167 = sadd.s32 %s166, 1
      %p170 = scmp.eq.s32.totalorder %s19, 1
      %p171 = scmp.ne.s32.totalorder %s166, %s168
      %p172 = scmp.eq.s32.totalorder %s19, 0
      %p173 = por %p171, %p172
      %p174 = scmp.ne.s32.totalorder %s166, %s168
      %p175 = scmp.eq.s32.totalorder %s24, 1
      %p176 = por %p174, %p175
      %p177 = scmp.ne.s32.totalorder %s168, %s169
      %p178 = scmp.eq.s32.totalorder %s24, 0
      %p179 = por %p177, %p178
      %p180 = scmp.ne.s32.totalorder %s168, %s169
      %p181 = scmp.eq.s32.totalorder %s25, 1
      %p182 = por %p180, %p181
      %p184 = scmp.ne.s32.totalorder %s169, %s183
      %p185 = scmp.eq.s32.totalorder %s25, 0
      %p186 = por %p184, %p185
      %s187 = ssub.s32 %s26, %s38
      %p188 = scmp.eq.s32.totalorder %s187, 0
      %s190 = sadd.s32 %s189, 1
      %s191 = scalar_select %p188, %s189, %s190
      %p194 = pneg %p188
      %p195 = scmp.eq.s32.totalorder %s19, 1
      %p196 = por %p194, %p195
      %p197 = scmp.ne.s32.totalorder %s189, %s192
      %p198 = scmp.eq.s32.totalorder %s19, 0
      %p199 = por %p197, %p198
      %p200 = scmp.ne.s32.totalorder %s189, %s192
      %p201 = scmp.eq.s32.totalorder %s24, 1
      %p202 = por %p200, %p201
      %p203 = scmp.ne.s32.totalorder %s192, %s193
      %p204 = scmp.eq.s32.totalorder %s24, 0
      %p205 = por %p203, %p204
      %p206 = scmp.ne.s32.totalorder %s192, %s193
      %p207 = scmp.eq.s32.totalorder %s25, 1
      %p208 = por %p206, %p207
      %p210 = scmp.ne.s32.totalorder %s193, %s209
      %p211 = scmp.eq.s32.totalorder %s25, 0
      %p212 = por %p210, %p211
      %p213 = scmp.le.s32.totalorder 1, %s19
      %p214 = scmp.lt.s32.totalorder %s19, 3
      %p215 = pnand %p213, %p214
      %p216 = pneg %p215
      // Predicated region
      $region9: #{tpu_custom_call.1} parent=5 // pred_check
        _
      $region10: #{tpu_custom_call.1} parent=5 // pred_check_branch
        %218 = sbr.rel (%p215) target = $region12
      $region11: #{tpu_custom_call.1} parent=5 // pred_region
        %s219 = ssub.s32 %s19, 1
        // Predicated region
        $region13: #{tpu_custom_call.1} parent=11 // pred_check
          %p220 = pneg %p85
        $region14: #{tpu_custom_call.1} parent=11 // pred_check_branch
          %222 = sbr.rel (%p220) target = $region16
        $region15: #{tpu_custom_call.1} parent=11 // pred_region
          %s223 = smul.u32 16, %s29
          %s225 = ssub.s32 1024, 1024
          %226 = vsyncadd [#allocation4], %s225
          %s227 = smul.addr %s223, 64
          %s228 = scalar_lea.hbm %s1, %s227
          %s229 = sshll.u32 [#allocation3], 4
          %s230 = int_to_ptr.vmem [resolvable:$true] %s229
          %235 = dma.hbm_to_vmem [thread:$0]  %s228, 1024, %s230, [#allocation4], 64, 64, 4
        $region16: #{tpu_custom_call.1} parent=11 // pred_fallthru
          _
        // Predicated region
        $region17: #{tpu_custom_call.1} parent=11 // pred_check
          %p236 = pneg %p158
        $region18: #{tpu_custom_call.1} parent=11 // pred_check_branch
          %238 = sbr.rel (%p236) target = $region20
        $region19: #{tpu_custom_call.1} parent=11 // pred_region
          %s240 = ssub.s32 2048, 2048
          %241 = vsyncadd [#allocation7], %s240
          %s242 = sshll.u32 [#allocation8], 4
          %s243 = int_to_ptr.vmem [resolvable:$true] %s242
          %248 = dma.hbm_to_vmem [thread:$0]  %s4, 2048, %s243, [#allocation7], 64, 64, 4
        $region20: #{tpu_custom_call.1} parent=11 // pred_fallthru
          _
        // Predicated region
        $region21: #{tpu_custom_call.1} parent=11 // pred_check
          %p249 = pneg %p179
        $region22: #{tpu_custom_call.1} parent=11 // pred_check_branch
          %251 = sbr.rel (%p249) target = $region24
        $region23: #{tpu_custom_call.1} parent=11 // pred_region
          _
        $region24: #{tpu_custom_call.1} parent=11 // pred_fallthru
          _
      $region12: #{tpu_custom_call.1} parent=5 // pred_fallthru
        _
      %p252 = scmp.lt.s32.totalorder %s19, 2
      // Predicated region
      $region25: #{tpu_custom_call.1} parent=5 // pred_check
        %p253 = pneg %p252
      $region26: #{tpu_custom_call.1} parent=5 // pred_check_branch
        %255 = sbr.rel (%p253) target = $region28
      $region27: #{tpu_custom_call.1} parent=5 // pred_region
        // Predicated region
        $region29: #{tpu_custom_call.1} parent=27 // pred_check
          %p256 = pneg %p53
        $region30: #{tpu_custom_call.1} parent=27 // pred_check_branch
          %258 = sbr.rel (%p256) target = $region32
        $region31: #{tpu_custom_call.1} parent=27 // pred_region
          %s259 = smul.u32 2, %s26
          %p260 = scmp.lt.s32.totalorder %s259, 3
          %s261 = scalar_select %p260, %s259, 3
          %p262 = scmp.lt.s32.totalorder %s27, 0
          %s263 = scalar_select %p262, %s27, 0
          %s264 = sadd.s32 %s263, %s261
          %s265 = smul.addr %s264, 4
          %s266 = scalar_lea.vmem %s0, %s265
          %s267 = smul.u32 2, %s26
        $region32: #{tpu_custom_call.1} parent=27 // pred_fallthru
          _
        // Predicated region
        $region33: #{tpu_custom_call.1} parent=27 // pred_check
          %p268 = pneg %p105
        $region34: #{tpu_custom_call.1} parent=27 // pred_check_branch
          %270 = sbr.rel (%p268) target = $region36
        $region35: #{tpu_custom_call.1} parent=27 // pred_region
          %s271 = sand.u32 %s19, 1
          %s272 = scalar_lea.sflag [#allocation7], %s271
          %s273 = sand.u32 %s95, 1
          %s274 = smul.addr %s273, 8
          %s275 = scalar_lea.vmem [#allocation6], %s274
          %s276 = smul.u32 2, %s26
          %s278 = ssub.s32 128, 128
          %279 = vsyncadd %s272, %s278
          %s280 = smul.addr %s276, 64
          %s281 = scalar_lea.hbm %s2, %s280
          %s282 = sshll.u32 %s275, 4
          %s283 = int_to_ptr.vmem [resolvable:$true] %s282
          %288 = dma.hbm_to_vmem [thread:$0]  %s281, 128, %s283, %s272, 64, 64, 4
        $region36: #{tpu_custom_call.1} parent=27 // pred_fallthru
          _
        // Predicated region
        $region37: #{tpu_custom_call.1} parent=27 // pred_check
          %p289 = pneg %p131
        $region38: #{tpu_custom_call.1} parent=27 // pred_check_branch
          %291 = sbr.rel (%p289) target = $region40
        $region39: #{tpu_custom_call.1} parent=27 // pred_region
          %s292 = smul.u32 2, %s26
          %p293 = scmp.lt.s32.totalorder %s292, 3
          %s294 = scalar_select %p293, %s292, 3
          %s295 = smul.addr %s294, 8
          %s296 = scalar_lea.vmem %s3, %s295
          %s297 = smul.u32 2, %s26
        $region40: #{tpu_custom_call.1} parent=27 // pred_fallthru
          _
      $region28: #{tpu_custom_call.1} parent=5 // pred_fallthru
        _
      %p298 = scmp.le.s32.totalorder 1, %s19
      %p299 = scmp.lt.s32.totalorder %s19, 3
      %p300 = pnand %p298, %p299
      %p301 = pneg %p300
      // Predicated region
      $region41: #{tpu_custom_call.1} parent=5 // pred_check
        _
      $region42: #{tpu_custom_call.1} parent=5 // pred_check_branch
        %303 = sbr.rel (%p300) target = $region44
      $region43: #{tpu_custom_call.1} parent=5 // pred_region
        %s304 = ssub.s32 %s19, 1
        // Predicated region
        $region45: #{tpu_custom_call.1} parent=43 // pred_check
          %p305 = pneg %p85
        $region46: #{tpu_custom_call.1} parent=43 // pred_check_branch
          %307 = sbr.rel (%p305) target = $region48
        $region47: #{tpu_custom_call.1} parent=43 // pred_region
          %308 = dma.done [#allocation4], 1024
        $region48: #{tpu_custom_call.1} parent=43 // pred_fallthru
          _
        %s309 = sand.u32 %s24, 1
        %s310 = scalar_lea.sflag [#allocation7], %s309
        %s311 = sand.u32 %s98, 1
        %s312 = smul.addr %s311, 8
        %s313 = scalar_lea.vmem [#allocation6], %s312
        // Predicated region
        $region49: #{tpu_custom_call.1} parent=43 // pred_check
          %p314 = pneg %p111
        $region50: #{tpu_custom_call.1} parent=43 // pred_check_branch
          %316 = sbr.rel (%p314) target = $region52
        $region51: #{tpu_custom_call.1} parent=43 // pred_region
          %317 = dma.done %s310, 128
        $region52: #{tpu_custom_call.1} parent=43 // pred_fallthru
          _
        // Predicated region
        $region53: #{tpu_custom_call.1} parent=43 // pred_check
          %p318 = pneg %p158
        $region54: #{tpu_custom_call.1} parent=43 // pred_check_branch
          %320 = sbr.rel (%p318) target = $region56
        $region55: #{tpu_custom_call.1} parent=43 // pred_region
          %321 = dma.done [#allocation7], 2048
        $region56: #{tpu_custom_call.1} parent=43 // pred_fallthru
          _
        %s322 = smul.u32 2, %s28
        %p323 = scmp.lt.s32.totalorder %s322, 3
        %s324 = scalar_select %p323, %s322, 3
        %p325 = scmp.lt.s32.totalorder %s29, 0
        %s326 = scalar_select %p325, %s29, 0
        %s327 = sadd.s32 %s326, %s324
        %s328 = smul.addr %s327, 4
        %s329 = scalar_lea.vmem %s0, %s328
        %p330 = pneg %p59
        %p331 = pneg %p56
        %p332 = pneg %p85
        %p333 = pneg %p82
        %s334 = sand.u32 %s24, 1
        %s335 = scalar_lea.sflag [#allocation7], %s334
        %s336 = sand.u32 %s98, 1
        %s337 = smul.addr %s336, 8
        %s338 = scalar_lea.vmem [#allocation6], %s337
        %p339 = pneg %p111
        %p340 = pneg %p108
        %s341 = smul.u32 2, %s28
        %p342 = scmp.lt.s32.totalorder %s341, 3
        %s343 = scalar_select %p342, %s341, 3
        %s344 = smul.addr %s343, 8
        %s345 = scalar_lea.vmem %s3, %s344
        %p346 = pneg %p137
        %p347 = pneg %p134
        %p348 = pneg %p158
        %p349 = pneg %p155
        %p350 = pneg %p179
        %p351 = pneg %p176
        %p352 = pneg %p205
        %p353 = pneg %p202
        %s354 = sand.u32 %s192, 1
        %s355 = scalar_lea.sflag [#allocation5], %s354
        %s356 = sand.u32 %s192, 1
        %s357 = smul.addr %s356, 8
        %s358 = scalar_lea.vmem [#allocation9], %s357
        %s359 = smul.u32 2, %s28
        %p360 = scmp.lt.s32.totalorder %s359, 3
        %s361 = scalar_select %p360, %s359, 3
        %p362 = scmp.lt.s32.totalorder %s29, 0
        %s363 = scalar_select %p362, %s29, 0
        %s364 = sadd.s32 %s363, %s361
        %s365 = smul.addr %s364, 4
        %s366 = scalar_lea.vmem %s0, %s365
        %s367 = smul.u32 2, %s28
        %s368 = smul.u32 16, %s29
        %s369 = smul.u32 2, %s28
        %s370 = smul.u32 2, %s28
        %p371 = scmp.lt.s32.totalorder %s370, 3
        %s372 = scalar_select %p371, %s370, 3
        %s373 = smul.addr %s372, 8
        %s374 = scalar_lea.vmem %s3, %s373
        %s375 = smul.u32 2, %s28
        %s376 = smul.u32 2, %s28
        %p378 = scmp.eq.s32.totalorder %s29, 0
        // Predicated region
        $region57: #{tpu_custom_call.1} parent=43 // pred_check
          %p379 = pneg %p378
        $region58: #{tpu_custom_call.1} parent=43 // pred_check_branch
          %381 = sbr.rel (%p379) target = $region60
        $region59: #{tpu_custom_call.1} parent=43 // pred_region
          %382 = vst [vmem:[#allocation2] sm:$0xff] 0.0
          %383 = vst [vmem:[#allocation2 + $0x8] sm:$0xff] 0.0
        $region60: #{tpu_custom_call.1} parent=43 // pred_fallthru
          _
        %v384 = vld [vmem:[#allocation2] sm:$0xff]
        %v385 = vld [vmem:[#allocation2 + $0x8] sm:$0xff]
        %v386 = vld [vmem:[%s366] sm:$0xf]
        %v387 = vld [vmem:[%s366 + $0x4] sm:$0xf]
        %v388 = vld [vmem:[#allocation3] sm:$0xf]
        %v389 = vld [vmem:[#allocation3 + $0x4] sm:$0xf]
        %v390 = vld [vmem:[#allocation3 + $0x8] sm:$0xf]
        %v391 = vld [vmem:[#allocation3 + $0xc] sm:$0xf]
        %v392 = vld [vmem:[#allocation3 + $0x10] sm:$0xf]
        %v393 = vld [vmem:[#allocation3 + $0x14] sm:$0xf]
        %v394 = vld [vmem:[#allocation3 + $0x18] sm:$0xf]
        %v395 = vld [vmem:[#allocation3 + $0x1c] sm:$0xf]
        %v396 = vld [vmem:[#allocation3 + $0x20] sm:$0xf]
        %v397 = vld [vmem:[#allocation3 + $0x24] sm:$0xf]
        %v398 = vld [vmem:[#allocation3 + $0x28] sm:$0xf]
        %v399 = vld [vmem:[#allocation3 + $0x2c] sm:$0xf]
        %v400 = vld [vmem:[#allocation3 + $0x30] sm:$0xf]
        %v401 = vld [vmem:[#allocation3 + $0x34] sm:$0xf]
        %v402 = vld [vmem:[#allocation3 + $0x38] sm:$0xf]
        %v403 = vld [vmem:[#allocation3 + $0x3c] sm:$0xf]
        %v406 = vunpack.c.l.b16 %v386
        %v407 = vunpack.c.l.b16 %v387
        %v408 = vpack.c.b16 %v407, %v406
        %v426 = vunpack.c.l.b16 %v388
        %v427 = vunpack.c.l.b16 %v389
        %v428 = vunpack.c.l.b16 %v390
        %v429 = vunpack.c.l.b16 %v391
        %v430 = vunpack.c.l.b16 %v392
        %v431 = vunpack.c.l.b16 %v393
        %v432 = vunpack.c.l.b16 %v394
        %v433 = vunpack.c.l.b16 %v395
        %v434 = vunpack.c.l.b16 %v396
        %v435 = vunpack.c.l.b16 %v397
        %v436 = vunpack.c.l.b16 %v398
        %v437 = vunpack.c.l.b16 %v399
        %v438 = vunpack.c.l.b16 %v400
        %v439 = vunpack.c.l.b16 %v401
        %v440 = vunpack.c.l.b16 %v402
        %v441 = vunpack.c.l.b16 %v403
        %v442 = vpack.c.b16 %v427, %v426
        %v443 = vpack.c.b16 %v429, %v428
        %v444 = vpack.c.b16 %v431, %v430
        %v445 = vpack.c.b16 %v433, %v432
        %v446 = vpack.c.b16 %v435, %v434
        %v447 = vpack.c.b16 %v437, %v436
        %v448 = vpack.c.b16 %v439, %v438
        %v449 = vpack.c.b16 %v441, %v440
        %458 = vmatprep.subr.bf16.mxu0 0
        %459 = vmatpush1.bf16.msra.mxu0 %v449
        %460 = vmatprep.subr.bf16.mxu0 0
        %461 = vmatpush1.bf16.msra.mxu0 %v448
        %462 = vmatprep.subr.bf16.mxu0 0
        %463 = vmatpush1.bf16.msra.mxu0 %v447
        %464 = vmatprep.subr.bf16.mxu0 0
        %465 = vmatpush1.bf16.msra.mxu0 %v446
        %466 = vmatprep.subr.bf16.mxu0 0
        %467 = vmatpush1.bf16.msra.mxu0 %v445
        %468 = vmatprep.subr.bf16.mxu0 0
        %469 = vmatpush1.bf16.msra.mxu0 %v444
        %470 = vmatprep.subr.bf16.mxu0 0
        %471 = vmatpush1.bf16.msra.mxu0 %v443
        %472 = vmatprep.subr.bf16.mxu0 0
        %473 = vmatpush1.bf16.msra.mxu0 %v442
        %474 = vmatprep.subr.bf16.mxu0 0
        %475 = vmatpush2.bf16.msra.mxu0 0
        %476 = vmatprep.subr.bf16.mxu0 0
        %477 = vmatpush2.bf16.msra.mxu0 0
        %478 = vmatprep.subr.bf16.mxu0 0
        %479 = vmatpush2.bf16.msra.mxu0 0
        %480 = vmatprep.subr.bf16.mxu0 0
        %481 = vmatpush2.bf16.msra.mxu0 0
        %482 = vmatprep.subr.bf16.mxu0 0
        %483 = vmatpush2.bf16.msra.mxu0 0
        %484 = vmatprep.subr.bf16.mxu0 0
        %485 = vmatpush2.bf16.msra.mxu0 0
        %486 = vmatprep.subr.bf16.mxu0 0
        %487 = vmatpush2.bf16.msra.mxu0 0
        %488 = vmatprep.subr.bf16.mxu0 0
        %489 = vmatpush2.bf16.msra.mxu0 0
        %490 = vmatprep.mubr.bf16.mxu0 0
        %491 = vmatmul.mubr.bf16.gmra.mxu0 %v408
        %v492 = vpop.f32.mrf.mxu0
        %v493 = vadd.f32 0.0, %v492
        %v494 = vpop.f32.mrf.mxu0
        %v495 = vpop.f32.mrf.mxu0
        %v496 = vadd.f32 0.0, %v495
        %v497 = vpop.f32.mrf.mxu0
        %498 = vdwg.mxu0
        %v499 = vadd.f32 %v384, %v493
        %v500 = vadd.f32 %v385, %v496
        %501 = vst [vmem:[#allocation2] sm:$0xff] %v499
        %502 = vst [vmem:[#allocation2 + $0x8] sm:$0xff] %v500
        // Predicated region
        $region61: #{tpu_custom_call.1} parent=43 // pred_check
          %p503 = pneg %p378
        $region62: #{tpu_custom_call.1} parent=43 // pred_check_branch
          %505 = sbr.rel (%p503) target = $region64
        $region63: #{tpu_custom_call.1} parent=43 // pred_region
          %v506 = vld [vmem:[%s374] sm:$0xff]
          %v507 = vld [vmem:[%s374 + $0x8] sm:$0xff]
          %v508 = vrcp.pop %v506
          %v509 = vrcp.pop %v507
          %v510 = vld [vmem:[#allocation2] sm:$0xff]
          %v511 = vld [vmem:[#allocation2 + $0x8] sm:$0xff]
          %513 = vset.pattern.permute.xlu0 0
          %514 = vperm.xlu0 %513, %v508
          %v515 = vpop.permute.xlu0 %514
          %518 = vset.pattern.permute.xlu0 0
          %519 = vperm.xlu0 %518, %v509
          %v520 = vpop.permute.xlu0 %519
          %v522 = vmul.f32 %v510, %v515
          %v523 = vmul.f32 %v511, %v520
          %v524 = vld [vmem:[%s313] sm:$0xf]
          %v525 = vld [vmem:[%s313 + $0x4] sm:$0xf]
          %v526 = vpack.c.bf16 %v523, %v522
          %v529 = vunpack.c.l.b16 %v524
          %v530 = vunpack.c.l.b16 %v525
          %v531 = vpack.c.b16 %v530, %v529
          %v533 = vld [vmem:[#allocation8] sm:$0xf]
          %v534 = vld [vmem:[#allocation8 + $0x4] sm:$0xf]
          %v535 = vld [vmem:[#allocation8 + $0x8] sm:$0xf]
          %v536 = vld [vmem:[#allocation8 + $0xc] sm:$0xf]
          %v537 = vld [vmem:[#allocation8 + $0x10] sm:$0xf]
          %v538 = vld [vmem:[#allocation8 + $0x14] sm:$0xf]
          %v539 = vld [vmem:[#allocation8 + $0x18] sm:$0xf]
          %v540 = vld [vmem:[#allocation8 + $0x1c] sm:$0xf]
          %v541 = vld [vmem:[#allocation8 + $0x20] sm:$0xf]
          %v542 = vld [vmem:[#allocation8 + $0x24] sm:$0xf]
          %v543 = vld [vmem:[#allocation8 + $0x28] sm:$0xf]
          %v544 = vld [vmem:[#allocation8 + $0x2c] sm:$0xf]
          %v545 = vld [vmem:[#allocation8 + $0x30] sm:$0xf]
          %v546 = vld [vmem:[#allocation8 + $0x34] sm:$0xf]
          %v547 = vld [vmem:[#allocation8 + $0x38] sm:$0xf]
          %v548 = vld [vmem:[#allocation8 + $0x3c] sm:$0xf]
          %v549 = vld [vmem:[#allocation8 + $0x40] sm:$0xf]
          %v550 = vld [vmem:[#allocation8 + $0x44] sm:$0xf]
          %v551 = vld [vmem:[#allocation8 + $0x48] sm:$0xf]
          %v552 = vld [vmem:[#allocation8 + $0x4c] sm:$0xf]
          %v553 = vld [vmem:[#allocation8 + $0x50] sm:$0xf]
          %v554 = vld [vmem:[#allocation8 + $0x54] sm:$0xf]
          %v555 = vld [vmem:[#allocation8 + $0x58] sm:$0xf]
          %v556 = vld [vmem:[#allocation8 + $0x5c] sm:$0xf]
          %v557 = vld [vmem:[#allocation8 + $0x60] sm:$0xf]
          %v558 = vld [vmem:[#allocation8 + $0x64] sm:$0xf]
          %v559 = vld [vmem:[#allocation8 + $0x68] sm:$0xf]
          %v560 = vld [vmem:[#allocation8 + $0x6c] sm:$0xf]
          %v561 = vld [vmem:[#allocation8 + $0x70] sm:$0xf]
          %v562 = vld [vmem:[#allocation8 + $0x74] sm:$0xf]
          %v563 = vld [vmem:[#allocation8 + $0x78] sm:$0xf]
          %v564 = vld [vmem:[#allocation8 + $0x7c] sm:$0xf]
          %v565 = vld [vmem:[%s5] sm:$0x1]
          %v567 = vlaneseq
          %v568 = vshrl.u32 %v567, 7
          %v569 = vsub.s32 0, %v568
          %v570 = vrot.slane %v565, %v569
          %v604 = vunpack.c.l.b16 %v533
          %v605 = vunpack.c.l.b16 %v534
          %v606 = vunpack.c.l.b16 %v535
          %v607 = vunpack.c.l.b16 %v536
          %v608 = vunpack.c.l.b16 %v537
          %v609 = vunpack.c.l.b16 %v538
          %v610 = vunpack.c.l.b16 %v539
          %v611 = vunpack.c.l.b16 %v540
          %v612 = vunpack.c.l.b16 %v541
          %v613 = vunpack.c.l.b16 %v542
          %v614 = vunpack.c.l.b16 %v543
          %v615 = vunpack.c.l.b16 %v544
          %v616 = vunpack.c.l.b16 %v545
          %v617 = vunpack.c.l.b16 %v546
          %v618 = vunpack.c.l.b16 %v547
          %v619 = vunpack.c.l.b16 %v548
          %v620 = vunpack.c.l.b16 %v549
          %v621 = vunpack.c.l.b16 %v550
          %v622 = vunpack.c.l.b16 %v551
          %v623 = vunpack.c.l.b16 %v552
          %v624 = vunpack.c.l.b16 %v553
          %v625 = vunpack.c.l.b16 %v554
          %v626 = vunpack.c.l.b16 %v555
          %v627 = vunpack.c.l.b16 %v556
          %v628 = vunpack.c.l.b16 %v557
          %v629 = vunpack.c.l.b16 %v558
          %v630 = vunpack.c.l.b16 %v559
          %v631 = vunpack.c.l.b16 %v560
          %v632 = vunpack.c.l.b16 %v561
          %v633 = vunpack.c.l.b16 %v562
          %v634 = vunpack.c.l.b16 %v563
          %v635 = vunpack.c.l.b16 %v564
          %v636 = vpack.c.b16 %v605, %v604
          %v637 = vpack.c.b16 %v607, %v606
          %v638 = vpack.c.b16 %v609, %v608
          %v639 = vpack.c.b16 %v611, %v610
          %v640 = vpack.c.b16 %v613, %v612
          %v641 = vpack.c.b16 %v615, %v614
          %v642 = vpack.c.b16 %v617, %v616
          %v643 = vpack.c.b16 %v619, %v618
          %v644 = vpack.c.b16 %v621, %v620
          %v645 = vpack.c.b16 %v623, %v622
          %v646 = vpack.c.b16 %v625, %v624
          %v647 = vpack.c.b16 %v627, %v626
          %v648 = vpack.c.b16 %v629, %v628
          %v649 = vpack.c.b16 %v631, %v630
          %v650 = vpack.c.b16 %v633, %v632
          %v651 = vpack.c.b16 %v635, %v634
          %668 = vmatprep.subr.bf16.mxu0 0
          %669 = vmatpush1.bf16.msra.mxu0 %v643
          %670 = vmatprep.subr.bf16.mxu0 0
          %671 = vmatpush1.bf16.msra.mxu0 %v642
          %672 = vmatprep.subr.bf16.mxu0 0
          %673 = vmatpush1.bf16.msra.mxu0 %v641
          %674 = vmatprep.subr.bf16.mxu0 0
          %675 = vmatpush1.bf16.msra.mxu0 %v640
          %676 = vmatprep.subr.bf16.mxu0 0
          %677 = vmatpush1.bf16.msra.mxu0 %v639
          %678 = vmatprep.subr.bf16.mxu0 0
          %679 = vmatpush1.bf16.msra.mxu0 %v638
          %680 = vmatprep.subr.bf16.mxu0 0
          %681 = vmatpush1.bf16.msra.mxu0 %v637
          %682 = vmatprep.subr.bf16.mxu0 0
          %683 = vmatpush1.bf16.msra.mxu0 %v636
          %684 = vmatprep.subr.bf16.mxu0 0
          %685 = vmatpush2.bf16.msra.mxu0 %v651
          %686 = vmatprep.subr.bf16.mxu0 0
          %687 = vmatpush2.bf16.msra.mxu0 %v650
          %688 = vmatprep.subr.bf16.mxu0 0
          %689 = vmatpush2.bf16.msra.mxu0 %v649
          %690 = vmatprep.subr.bf16.mxu0 0
          %691 = vmatpush2.bf16.msra.mxu0 %v648
          %692 = vmatprep.subr.bf16.mxu0 0
          %693 = vmatpush2.bf16.msra.mxu0 %v647
          %694 = vmatprep.subr.bf16.mxu0 0
          %695 = vmatpush2.bf16.msra.mxu0 %v646
          %696 = vmatprep.subr.bf16.mxu0 0
          %697 = vmatpush2.bf16.msra.mxu0 %v645
          %698 = vmatprep.subr.bf16.mxu0 0
          %699 = vmatpush2.bf16.msra.mxu0 %v644
          %700 = vmatprep.mubr.bf16.mxu0 %v526
          %701 = vmatmul.mubr.bf16.gmra.mxu0 %v531
          %v702 = vpop.f32.mrf.mxu0
          %v703 = vadd.f32 %v570, %v702
          %v704 = vpop.f32.mrf.mxu0
          %v705 = vpop.f32.mrf.mxu0
          %v706 = vadd.f32 %v570, %v705
          %v707 = vpop.f32.mrf.mxu0
          %708 = vdwg.mxu0
          %v709 = vmax.f32 %v703, 0.0
          %v710 = vmax.f32 %v706, 0.0
          %v711 = vpack.c.bf16 %v710, %v709
          %v713 = vunpack.c.l.b16 %v711
          %v714 = vunpack.c.h.b16 %v711
          %v715 = vpack.c.b16 %v713, %v713
          %v716 = vpack.c.b16 %v714, %v714
          %719 = vst [vmem:[%s358] sm:$0xf] %v715
          %720 = vst [vmem:[%s358 + $0x4] sm:$0xf] %v716
        $region64: #{tpu_custom_call.1} parent=43 // pred_fallthru
          _
        %s721 = sand.u32 %s192, 1
        %s722 = scalar_lea.sflag [#allocation5], %s721
        %s723 = sand.u32 %s192, 1
        %s724 = smul.addr %s723, 8
        %s725 = scalar_lea.vmem [#allocation9], %s724
        // Predicated region
        $region65: #{tpu_custom_call.1} parent=43 // pred_check
          %p726 = pneg %p202
        $region66: #{tpu_custom_call.1} parent=43 // pred_check_branch
          %728 = sbr.rel (%p726) target = $region68
        $region67: #{tpu_custom_call.1} parent=43 // pred_region
          %s729 = smul.u32 2, %s28
          %s731 = ssub.s32 128, 128
          %732 = vsyncadd %s722, %s731
          %s733 = smul.addr %s729, 64
          %s734 = scalar_lea.hbm %s6, %s733
          %s735 = sshll.u32 %s725, 4
          %s736 = int_to_ptr.vmem [resolvable:$true] %s735
          %741 = dma.vmem_to_hbm [thread:$0]  %s736, 128, %s734, %s722, 64, 64, 4
        $region68: #{tpu_custom_call.1} parent=43 // pred_fallthru
          _
      $region44: #{tpu_custom_call.1} parent=5 // pred_fallthru
        _
      %p742 = scmp.le.s32.totalorder 2, %s19
      // Predicated region
      $region69: #{tpu_custom_call.1} parent=5 // pred_check
        %p743 = pneg %p742
      $region70: #{tpu_custom_call.1} parent=5 // pred_check_branch
        %745 = sbr.rel (%p743) target = $region72
      $region71: #{tpu_custom_call.1} parent=5 // pred_region
        %s746 = ssub.s32 %s19, 2
        // Predicated region
        $region73: #{tpu_custom_call.1} parent=71 // pred_check
          %p747 = pneg %p208
        $region74: #{tpu_custom_call.1} parent=71 // pred_check_branch
          %749 = sbr.rel (%p747) target = $region76
        $region75: #{tpu_custom_call.1} parent=71 // pred_region
          %s750 = sand.u32 %s193, 1
          %s751 = scalar_lea.sflag [#allocation5], %s750
          %s752 = sand.u32 %s193, 1
          %s753 = smul.addr %s752, 8
          %s754 = scalar_lea.vmem [#allocation9], %s753
          %755 = dma.done %s751, 128
        $region76: #{tpu_custom_call.1} parent=71 // pred_fallthru
          _
      $region72: #{tpu_custom_call.1} parent=5 // pred_fallthru
        _
    $region6: #{tpu_custom_call.1} parent=1 // loop_footer
      %s23 = sadd.s32 1, %s19
    $region7: #{tpu_custom_call.1} parent=1 // loop_footer_branch
      %18 = sbr.rel target = $region3
    $region8: #{tpu_custom_call.1} parent=1 // loop_exit
      _
    %756 = vsyncpa [#allocation4], 1
    %s757 = scalar_lea.sflag [#allocation4], 1
    %758 = vsyncpa %s757, 1
    %759 = vsyncpa [#allocation7], 1
    %s760 = scalar_lea.sflag [#allocation7], 1
    %761 = vsyncpa %s760, 1
    %762 = vsyncpa [#allocation5], 1
    %s763 = scalar_lea.sflag [#allocation5], 1
    %764 = vsyncpa %s763, 1

</llo_original>
